<compile_context>
chip_gen: v5e
topology: v5e:2x2
jax: 0.10.0
libtpu: 0.0.40
codegen_flags: <defaults>
</compile_context>

<pallas_src>
import jax
import jax.numpy as jnp
from jax.experimental import pallas as pl
from jax.experimental.pallas import tpu as pltpu


# ----------------------------------------------------------------------------
# Kernel 1: a single forward evaluation (exact module forward, batch-tiled)
# ----------------------------------------------------------------------------
def _mlp_fwd_kernel(x_ref, z_ref, w1x_ref, w1z_ref, b1_ref, w2_ref, b2_ref,
                    w3_ref, b3_ref, out_ref):
    # Layer 1: split-W1 form of Lin1(concat([x, z])).  Tiny contraction dims
    # (dim_x / dim_z) are kept in f32; bias add + tanh in f32 (no bf16 VPU/EUP
    # on v5e).
    h = (jnp.dot(x_ref[...], w1x_ref[...], preferred_element_type=jnp.float32)
         + jnp.dot(z_ref[...], w1z_ref[...], preferred_element_type=jnp.float32)
         + b1_ref[...])
    h = jnp.tanh(h)
    # Layers 2/3: bf16 operands at the MXU, f32 accumulation.
    h = jnp.tanh(jnp.dot(h.astype(jnp.bfloat16), w2_ref[...],
                         preferred_element_type=jnp.float32) + b2_ref[...])
    out_ref[...] = (jnp.dot(h.astype(jnp.bfloat16), w3_ref[...],
                            preferred_element_type=jnp.float32) + b3_ref[...])


def controlled_ode_forward(z, x, params, dim_z):
    """Pallas implementation of ControlledODE.forward(t, z, x) (x given)."""
    B = z.shape[0]
    dim_x = x.shape[-1]
    z_pad = params["b3"].shape[1]

    # Batch tile: full batch if small, else 512-row tiles (multiple of 8).
    block_b = B if B <= 512 else 512
    grid = (pl.cdiv(B, block_b),)

    def w_spec(a):
        return pl.BlockSpec(a.shape, lambda i: (0,) * a.ndim)  # resident weights

    out = pl.pallas_call(
        _mlp_fwd_kernel,
        out_shape=jax.ShapeDtypeStruct((B, z_pad), jnp.float32),
        grid=grid,
        in_specs=[
            pl.BlockSpec((block_b, dim_x), lambda i: (i, 0)),
            pl.BlockSpec((block_b, z.shape[-1]), lambda i: (i, 0)),
            w_spec(params["w1x"]), w_spec(params["w1z_s"]), w_spec(params["b1"]),
            w_spec(params["w2"]), w_spec(params["b2"]),
            w_spec(params["w3"]), w_spec(params["b3"]),
        ],
        out_specs=pl.BlockSpec((block_b, z_pad), lambda i: (i, 0)),
        compiler_params=pltpu.CompilerParams(
            dimension_semantics=("parallel",),
            vmem_limit_bytes=32 * 1024 * 1024,
        ),
    )(x, z, params["w1x"], params["w1z_s"], params["b1"],
      params["w2"], params["b2"], params["w3"], params["b3"])
    return out[:, :dim_z]


# ----------------------------------------------------------------------------
# Kernel 2: fused fixed-step Euler integrator (solver loop inside the kernel).
# Weights + state z stay resident in VMEM; x(t) is pipelined in chunk-by-chunk
# and each grid iteration runs `chunk` solver steps in an unrolled inner loop.
# ----------------------------------------------------------------------------
def _make_euler_kernel(dt, chunk, n_steps, n_steps_padded):
    needs_mask = n_steps_padded != n_steps

    def kernel(z0_ref, x_ref, w1x_ref, w1z_ref, b1_ref, w2_ref, b2_ref,
               w3_ref, b3_ref, z_ref):
        # z_ref (output block, constant index across the step axis) is the
        # carried state resident in VMEM.
        @pl.when(pl.program_id(0) == 0)
        def _():
            z_ref[...] = z0_ref[...]

        base = pl.program_id(0) * chunk

        def step(i, z):
            x = x_ref[i]                                     # [B, dim_x] (f32)
            h = (jnp.dot(x, w1x_ref[...], preferred_element_type=jnp.float32)
                 + jnp.dot(z.astype(jnp.bfloat16), w1z_ref[...],
                           preferred_element_type=jnp.float32)
                 + b1_ref[...])
            h = jnp.tanh(h)
            h = jnp.tanh(jnp.dot(h.astype(jnp.bfloat16), w2_ref[...],
                                 preferred_element_type=jnp.float32)
                         + b2_ref[...])
            dz = (jnp.dot(h.astype(jnp.bfloat16), w3_ref[...],
                          preferred_element_type=jnp.float32) + b3_ref[...])
            if needs_mask:
                dt_eff = jnp.where(base + i < n_steps,
                                   jnp.float32(dt), jnp.float32(0.0))
            else:
                dt_eff = jnp.float32(dt)
            return z + dt_eff * dz

        # Short, fixed trip-count inner loop: unroll for LLO visibility.
        z_ref[...] = jax.lax.fori_loop(0, chunk, step, z_ref[...], unroll=True)

    return kernel


def controlled_ode_euler(z0, x_traj, t_data, t_solver, params, dim_z, chunk=8):
    """Euler-integrate dz/dt = ODE(concat([x(t), z])) fully inside one kernel.

    x(t) uses the module's get_current_x nearest-time lookup (1-D time grid);
    that lookup is pure indexing glue done once in JAX before the kernel.
    """
    B, _, dim_x = x_traj.shape
    n_steps = t_solver.shape[0]
    dt = float(t_solver[1] - t_solver[0])
    z_pad = params["b3"].shape[1]

    # Glue (done once): nearest-time gather + step-major layout.
    idxs = jnp.argmin(jnp.abs(t_data[None, :] - t_solver[:, None]), axis=1)
    x_steps = x_traj[:, idxs, :].transpose(1, 0, 2)      # [n_steps, B, dim_x]

    # Chunk the solver axis; pad the trajectory to a chunk multiple (padded
    # steps are no-ops via a dt mask inside the kernel).
    chunk = max(1, min(chunk, n_steps))
    n_chunks = pl.cdiv(n_steps, chunk)
    n_steps_padded = n_chunks * chunk
    if n_steps_padded != n_steps:
        x_steps = jnp.pad(
            x_steps, ((0, n_steps_padded - n_steps), (0, 0), (0, 0)))

    # Pad z once to the lane-dense width (pad columns stay exactly zero).
    z0_p = jnp.pad(z0.astype(jnp.float32), ((0, 0), (0, z_pad - dim_z)))

    def w_spec(a):
        return pl.BlockSpec(a.shape, lambda s: (0,) * a.ndim)  # resident weights

    out = pl.pallas_call(
        _make_euler_kernel(dt, chunk, n_steps, n_steps_padded),
        out_shape=jax.ShapeDtypeStruct((B, z_pad), jnp.float32),
        grid=(n_chunks,),
        in_specs=[
            pl.BlockSpec((B, z_pad), lambda s: (0, 0)),           # z0 (resident)
            pl.BlockSpec((chunk, B, dim_x), lambda s: (s, 0, 0)),  # x per chunk
            w_spec(params["w1x"]), w_spec(params["w1z_p"]), w_spec(params["b1"]),
            w_spec(params["w2"]), w_spec(params["b2"]),
            w_spec(params["w3"]), w_spec(params["b3"]),
        ],
        out_specs=pl.BlockSpec((B, z_pad), lambda s: (0, 0)),     # carried state
        compiler_params=pltpu.CompilerParams(
            dimension_semantics=("arbitrary",),
            vmem_limit_bytes=32 * 1024 * 1024,
        ),
    )(z0_p, x_steps, params["w1x"], params["w1z_p"], params["b1"],
      params["w2"], params["b2"], params["w3"], params["b3"])
    return out[:, :dim_z]


# ----------------------------------------------------------------------------
# Parameter initialization (nn.Linear default: U(-1/sqrt(fan_in), 1/sqrt(fan_in)))
# and one-time prep (split W1, pad to lane width, cast big weights to bf16).
# ----------------------------------------------------------------------------
def init_params(key, dim_x, dim_z, hidden_size, dtype=jnp.float32):
    def linear(k, fan_in, fan_out):
        kw, kb = jax.random.split(k)
        bound = 1.0 / jnp.sqrt(jnp.float32(fan_in))
        w = jax.random.uniform(kw, (fan_in, fan_out), dtype, -bound, bound)
        b = jax.random.uniform(kb, (1, fan_out), dtype, -bound, bound)
        return w, b

    k1, k2, k3 = jax.random.split(key, 3)
    w1, b1 = linear(k1, dim_x + dim_z, hidden_size)
    w2, b2 = linear(k2, hidden_size, hidden_size)
    w3, b3 = linear(k3, hidden_size, dim_z)
    return {"w1": w1, "b1": b1, "w2": w2, "b2": b2, "w3": w3, "b3": b3}


def _round_up(n, m=128):
    return ((n + m - 1) // m) * m


def prepare_params(raw, dim_x, dim_z, hidden):
    h_pad = _round_up(max(hidden, 1))
    z_pad = _round_up(max(dim_z, 1))

    def pad_to(a, rows, cols):
        return jnp.pad(a, ((0, rows - a.shape[0]), (0, cols - a.shape[1])))

    w1 = raw["w1"]                     # [dim_x + dim_z, hidden]
    w1x = w1[:dim_x, :]
    w1z = w1[dim_x:, :]
    return {
        "w1x": pad_to(w1x, dim_x, h_pad),                           # f32 (tiny K)
        "w1z_s": pad_to(w1z, dim_z, h_pad),                         # f32 (tiny K)
        "w1z_p": pad_to(w1z, z_pad, h_pad).astype(jnp.bfloat16),    # bf16 (K=z_pad)
        "b1": pad_to(raw["b1"], 1, h_pad),
        "w2": pad_to(raw["w2"], h_pad, h_pad).astype(jnp.bfloat16),
        "b2": pad_to(raw["b2"], 1, h_pad),
        "w3": pad_to(raw["w3"], h_pad, z_pad).astype(jnp.bfloat16),
        "b3": pad_to(raw["b3"], 1, z_pad),
    }


# ----------------------------------------------------------------------------
# Pure-JAX references
# ----------------------------------------------------------------------------
def _ref_forward(z, x, p):
    za = jnp.concatenate([x, z], axis=-1)
    h = jnp.tanh(za @ p["w1"] + p["b1"])
    h = jnp.tanh(h @ p["w2"] + p["b2"])
    return h @ p["w3"] + p["b3"]


def _ref_euler(z0, x_steps, dt, p):
    def step(z, x):
        return z + dt * _ref_forward(z, x, p), None
    zT, _ = jax.lax.scan(step, z0, x_steps)
    return zT


if __name__ == "__main__":
    B, dim_x, dim_z, hidden, seq = 8, 4, 4, 32, 8

    key = jax.random.PRNGKey(0)
    kp, kz, kx = jax.random.split(key, 3)

    raw = init_params(kp, dim_x, dim_z, hidden)
    params = prepare_params(raw, dim_x, dim_z, hidden)

    z = jax.random.normal(kz, (B, dim_z), jnp.float32)
    x_traj = jax.random.normal(kx, (B, seq, dim_x), jnp.float32)   # stored self.x
    t_grid = jnp.linspace(0.0, 1.0, seq)                           # stored self.t

    # x=None path (get_current_x, 1-D shared time grid): nearest-time lookup glue.
    # TODO(synk): the batched-time variant (2-D self.t) of get_current_x is
    # per-batch gather glue outside the kernel and is not implemented here.
    t = jnp.float32(0.37)
    idx = jnp.argmin(jnp.abs(t_grid - t))
    x = x_traj[:, idx, :]                                          # [B, dim_x]

    # 1) Single forward evaluation (exact module forward).
    out = jax.block_until_ready(controlled_ode_forward(z, x, params, dim_z))
    ref = _ref_forward(z, x, raw)
    assert out.shape == (B, dim_z)
    assert jnp.allclose(out, ref, atol=2e-2, rtol=2e-2), "forward mismatch"

    # 2) Fused in-kernel Euler integration over the stored control trajectory.
    t_solver = jnp.linspace(0.0, 1.0, seq)
    zT = jax.block_until_ready(
        controlled_ode_euler(z, x_traj, t_grid, t_solver, params, dim_z, chunk=4))
    idxs = jnp.argmin(jnp.abs(t_grid[None, :] - t_solver[:, None]), axis=1)
    x_steps = x_traj[:, idxs, :].transpose(1, 0, 2)
    dt = float(t_solver[1] - t_solver[0])
    zT_ref = _ref_euler(z, x_steps, dt, raw)
    assert zT.shape == (B, dim_z)
    assert jnp.allclose(zT, zT_ref, atol=3e-2, rtol=3e-2), "euler mismatch"

    print("KERNEL_OK")
</pallas_src>

<mosaic_0001>
module attributes {stable_mosaic.version = 11 : i64} {
  func.func @_mlp_fwd_kernel(%arg0: i32, %arg1: memref<8x4xf32, #tpu.memory_space<vmem>>, %arg2: memref<8x4xf32, #tpu.memory_space<vmem>>, %arg3: memref<4x128xf32, #tpu.memory_space<vmem>>, %arg4: memref<4x128xf32, #tpu.memory_space<vmem>>, %arg5: memref<1x128xf32, #tpu.memory_space<vmem>>, %arg6: memref<128x128xbf16, #tpu.memory_space<vmem>>, %arg7: memref<1x128xf32, #tpu.memory_space<vmem>>, %arg8: memref<128x128xbf16, #tpu.memory_space<vmem>>, %arg9: memref<1x128xf32, #tpu.memory_space<vmem>>, %arg10: memref<8x128xf32, #tpu.memory_space<vmem>>) attributes {dimension_semantics = [#tpu.dimension_semantics<parallel>], iteration_bounds = array<i64: 1>, scalar_prefetch = 0 : i64, scratch_operands = 0 : i64, tpu.core_type = #tpu.core_type<tc>, window_params = [{transform_indices = @transform_0, window_bounds = array<i64: 8, 4>}, {transform_indices = @transform_1, window_bounds = array<i64: 8, 4>}, {pipeline_mode = #tpu.pipeline_mode<synchronous>, transform_indices = @transform_2, window_bounds = array<i64: 4, 128>}, {pipeline_mode = #tpu.pipeline_mode<synchronous>, transform_indices = @transform_3, window_bounds = array<i64: 4, 128>}, {pipeline_mode = #tpu.pipeline_mode<synchronous>, transform_indices = @transform_4, window_bounds = array<i64: 1, 128>}, {pipeline_mode = #tpu.pipeline_mode<synchronous>, transform_indices = @transform_5, window_bounds = array<i64: 128, 128>}, {pipeline_mode = #tpu.pipeline_mode<synchronous>, transform_indices = @transform_6, window_bounds = array<i64: 1, 128>}, {pipeline_mode = #tpu.pipeline_mode<synchronous>, transform_indices = @transform_7, window_bounds = array<i64: 128, 128>}, {pipeline_mode = #tpu.pipeline_mode<synchronous>, transform_indices = @transform_8, window_bounds = array<i64: 1, 128>}, {transform_indices = @transform_9, window_bounds = array<i64: 8, 128>}]} {
    %c0 = arith.constant 0 : index
    %c0_0 = arith.constant 0 : index
    %0 = vector.load %arg1[%c0, %c0_0] : memref<8x4xf32, #tpu.memory_space<vmem>>, vector<8x4xf32>
    %c0_1 = arith.constant 0 : index
    %c0_2 = arith.constant 0 : index
    %1 = vector.load %arg3[%c0_1, %c0_2] : memref<4x128xf32, #tpu.memory_space<vmem>>, vector<4x128xf32>
    %cst = arith.constant dense<0.000000e+00> : vector<8x128xf32>
    %2 = tpu.matmul %0, %1, %cst {dimension_numbers = #tpu.dot_dimension_numbers<[1], [0], [0], [1], [0, 0, 1, 1], [], []>} : vector<8x4xf32>, vector<4x128xf32>, vector<8x128xf32> -> vector<8x128xf32>
    %c0_3 = arith.constant 0 : index
    %c0_4 = arith.constant 0 : index
    %3 = vector.load %arg2[%c0_3, %c0_4] : memref<8x4xf32, #tpu.memory_space<vmem>>, vector<8x4xf32>
    %c0_5 = arith.constant 0 : index
    %c0_6 = arith.constant 0 : index
    %4 = vector.load %arg4[%c0_5, %c0_6] : memref<4x128xf32, #tpu.memory_space<vmem>>, vector<4x128xf32>
    %cst_7 = arith.constant dense<0.000000e+00> : vector<8x128xf32>
    %5 = tpu.matmul %3, %4, %cst_7 {dimension_numbers = #tpu.dot_dimension_numbers<[1], [0], [0], [1], [0, 0, 1, 1], [], []>} : vector<8x4xf32>, vector<4x128xf32>, vector<8x128xf32> -> vector<8x128xf32>
    %6 = arith.addf %2, %5 : vector<8x128xf32>
    %c0_8 = arith.constant 0 : index
    %c0_9 = arith.constant 0 : index
    %7 = vector.load %arg5[%c0_8, %c0_9] : memref<1x128xf32, #tpu.memory_space<vmem>>, vector<1x128xf32>
    %8 = vector.broadcast %7 : vector<1x128xf32> to vector<8x128xf32>
    %9 = arith.addf %6, %8 : vector<8x128xf32>
    %10 = math.tanh %9 : vector<8x128xf32>
    %11 = arith.truncf %10 : vector<8x128xf32> to vector<8x128xbf16>
    %c0_10 = arith.constant 0 : index
    %c0_11 = arith.constant 0 : index
    %12 = vector.load %arg6[%c0_10, %c0_11] : memref<128x128xbf16, #tpu.memory_space<vmem>>, vector<128x128xbf16>
    %cst_12 = arith.constant dense<0.000000e+00> : vector<8x128xf32>
    %13 = tpu.matmul %11, %12, %cst_12 {dimension_numbers = #tpu.dot_dimension_numbers<[1], [0], [0], [1], [0, 0, 1, 1], [], []>} : vector<8x128xbf16>, vector<128x128xbf16>, vector<8x128xf32> -> vector<8x128xf32>
    %c0_13 = arith.constant 0 : index
    %c0_14 = arith.constant 0 : index
    %14 = vector.load %arg7[%c0_13, %c0_14] : memref<1x128xf32, #tpu.memory_space<vmem>>, vector<1x128xf32>
    %15 = vector.broadcast %14 : vector<1x128xf32> to vector<8x128xf32>
    %16 = arith.addf %13, %15 : vector<8x128xf32>
    %17 = math.tanh %16 : vector<8x128xf32>
    %18 = arith.truncf %17 : vector<8x128xf32> to vector<8x128xbf16>
    %c0_15 = arith.constant 0 : index
    %c0_16 = arith.constant 0 : index
    %19 = vector.load %arg8[%c0_15, %c0_16] : memref<128x128xbf16, #tpu.memory_space<vmem>>, vector<128x128xbf16>
    %cst_17 = arith.constant dense<0.000000e+00> : vector<8x128xf32>
    %20 = tpu.matmul %18, %19, %cst_17 {dimension_numbers = #tpu.dot_dimension_numbers<[1], [0], [0], [1], [0, 0, 1, 1], [], []>} : vector<8x128xbf16>, vector<128x128xbf16>, vector<8x128xf32> -> vector<8x128xf32>
    %c0_18 = arith.constant 0 : index
    %c0_19 = arith.constant 0 : index
    %21 = vector.load %arg9[%c0_18, %c0_19] : memref<1x128xf32, #tpu.memory_space<vmem>>, vector<1x128xf32>
    %22 = vector.broadcast %21 : vector<1x128xf32> to vector<8x128xf32>
    %23 = arith.addf %20, %22 : vector<8x128xf32>
    %c0_20 = arith.constant 0 : index
    %c0_21 = arith.constant 0 : index
    %24 = vector.load %arg10[%c0_20, %c0_21] : memref<8x128xf32, #tpu.memory_space<vmem>>, vector<8x128xf32>
    tpu.vector_store %arg10[%c0_20, %c0_21], %23 {strides = array<i32>} : memref<8x128xf32, #tpu.memory_space<vmem>>, vector<8x128xf32>,
    return
  }
  func.func @transform_0(%arg0: i32) -> (i32, i32) {
    %c0_i32 = arith.constant 0 : i32
    %c0_i32_0 = arith.constant 0 : i32
    return %arg0, %c0_i32 : i32, i32
  }
  func.func @transform_1(%arg0: i32) -> (i32, i32) {
    %c0_i32 = arith.constant 0 : i32
    %c0_i32_0 = arith.constant 0 : i32
    return %arg0, %c0_i32 : i32, i32
  }
  func.func @transform_2(%arg0: i32) -> (i32, i32) {
    %c0_i32 = arith.constant 0 : i32
    %c0_i32_0 = arith.constant 0 : i32
    %c0_i32_1 = arith.constant 0 : i32
    return %c0_i32, %c0_i32_0 : i32, i32
  }
  func.func @transform_3(%arg0: i32) -> (i32, i32) {
    %c0_i32 = arith.constant 0 : i32
    %c0_i32_0 = arith.constant 0 : i32
    %c0_i32_1 = arith.constant 0 : i32
    return %c0_i32, %c0_i32_0 : i32, i32
  }
  func.func @transform_4(%arg0: i32) -> (i32, i32) {
    %c0_i32 = arith.constant 0 : i32
    %c0_i32_0 = arith.constant 0 : i32
    %c0_i32_1 = arith.constant 0 : i32
    return %c0_i32, %c0_i32_0 : i32, i32
  }
  func.func @transform_5(%arg0: i32) -> (i32, i32) {
    %c0_i32 = arith.constant 0 : i32
    %c0_i32_0 = arith.constant 0 : i32
    %c0_i32_1 = arith.constant 0 : i32
    return %c0_i32, %c0_i32_0 : i32, i32
  }
  func.func @transform_6(%arg0: i32) -> (i32, i32) {
    %c0_i32 = arith.constant 0 : i32
    %c0_i32_0 = arith.constant 0 : i32
    %c0_i32_1 = arith.constant 0 : i32
    return %c0_i32, %c0_i32_0 : i32, i32
  }
  func.func @transform_7(%arg0: i32) -> (i32, i32) {
    %c0_i32 = arith.constant 0 : i32
    %c0_i32_0 = arith.constant 0 : i32
    %c0_i32_1 = arith.constant 0 : i32
    return %c0_i32, %c0_i32_0 : i32, i32
  }
  func.func @transform_8(%arg0: i32) -> (i32, i32) {
    %c0_i32 = arith.constant 0 : i32
    %c0_i32_0 = arith.constant 0 : i32
    %c0_i32_1 = arith.constant 0 : i32
    return %c0_i32, %c0_i32_0 : i32, i32
  }
  func.func @transform_9(%arg0: i32) -> (i32, i32) {
    %c0_i32 = arith.constant 0 : i32
    %c0_i32_0 = arith.constant 0 : i32
    return %arg0, %c0_i32 : i32, i32
  }
}

</mosaic_0001>

<llo_original>
// kernel: tpu_custom_call.1
$region0: #{tpu_custom_call.1}
  #allocation0 [shape = 'u32[]', space=smem, size = 0x4, offset = 0x4, fixed_abs, tag = 'smem constant byte address 0x4 - core index']
  #allocation1 [shape = 'u32[72,128]{1,0:T(1,128)}', space=vmem, size = 0x9000, scoped, tag = 'internal scratch']
  %s0 = inlined_call_operand.vmem [shape: f32[8,4], index: 0, kind: input, shape index: {}]
  %s1 = inlined_call_operand.vmem [shape: f32[8,4], index: 1, kind: input, shape index: {}]
  %s2 = inlined_call_operand.vmem [shape: f32[4,128], index: 2, kind: input, shape index: {}]
  %s3 = inlined_call_operand.vmem [shape: f32[4,128], index: 3, kind: input, shape index: {}]
  %s4 = inlined_call_operand.vmem [shape: f32[1,128], index: 4, kind: input, shape index: {}]
  %s5 = inlined_call_operand.hbm [shape: bf16[128,128], index: 5, kind: input, shape index: {}]
  %s6 = inlined_call_operand.vmem [shape: f32[1,128], index: 6, kind: input, shape index: {}]
  %s7 = inlined_call_operand.hbm [shape: bf16[128,128], index: 7, kind: input, shape index: {}]
  %s8 = inlined_call_operand.vmem [shape: f32[1,128], index: 8, kind: input, shape index: {}]
  %s9 = inlined_call_operand.hbm [shape: f32[8,128], index: 9, kind: output, shape index: {}]
  %s10 = sld [smem:[#allocation0]]
  $region54: #{tpu_custom_call.1} parent=0
    _
  %s12 = ssub.s32 1, %s10
  %s13 = scalar_select 0, %s12, %s10
  $region1: #{tpu_custom_call.1} parent=0
    #allocation2 [shape = 'u8[32768]{0}', space=vmem, size = 0x8000, scoped, tag = 'input window, operand 5, single buffered']
    #allocation3 [shape = 's32[1]{0}', space=sflag, size = 0x4, scoped, tag = 'scoped memory for tpu_custom_call.1']
    #allocation4 [shape = 's32[1]{0}', space=sflag, size = 0x4, scoped, tag = 'scoped memory for tpu_custom_call.1']
    #allocation5 [shape = 'u8[32768]{0}', space=vmem, size = 0x8000, scoped, tag = 'input window, operand 7, single buffered']
    #allocation6 [shape = 's32[1]{0}', space=sflag, size = 0x4, scoped, tag = 'scoped memory for tpu_custom_call.1']
    #allocation7 [shape = 'u8[4096]{0}', space=vmem, size = 0x1000, scoped, tag = 'output window, operand 0, single buffered']
    %14 = vsyncpa [#allocation3], 0
    %15 = vsyncpa [#allocation6], 0
    %16 = vsyncpa [#allocation4], 0
    // Predicated region
    $region2: #{tpu_custom_call.1} parent=1 // pred_check
      _
    $region3: #{tpu_custom_call.1} parent=1 // pred_check_branch
      %18 = sbr.rel (0) target = $region5
    $region4: #{tpu_custom_call.1} parent=1 // pred_region
      _
    $region5: #{tpu_custom_call.1} parent=1 // pred_fallthru
      _
    // Predicated region
    $region6: #{tpu_custom_call.1} parent=1 // pred_check
      _
    $region7: #{tpu_custom_call.1} parent=1 // pred_check_branch
      %20 = sbr.rel (0) target = $region9
    $region8: #{tpu_custom_call.1} parent=1 // pred_region
      _
    $region9: #{tpu_custom_call.1} parent=1 // pred_fallthru
      _
    // Predicated region
    $region10: #{tpu_custom_call.1} parent=1 // pred_check
      _
    $region11: #{tpu_custom_call.1} parent=1 // pred_check_branch
      %22 = sbr.rel (0) target = $region13
    $region12: #{tpu_custom_call.1} parent=1 // pred_region
      _
    $region13: #{tpu_custom_call.1} parent=1 // pred_fallthru
      _
    // Predicated region
    $region14: #{tpu_custom_call.1} parent=1 // pred_check
      _
    $region15: #{tpu_custom_call.1} parent=1 // pred_check_branch
      %24 = sbr.rel (0) target = $region17
    $region16: #{tpu_custom_call.1} parent=1 // pred_region
      _
    $region17: #{tpu_custom_call.1} parent=1 // pred_fallthru
      _
    // Predicated region
    $region18: #{tpu_custom_call.1} parent=1 // pred_check
      _
    $region19: #{tpu_custom_call.1} parent=1 // pred_check_branch
      %26 = sbr.rel (0) target = $region21
    $region20: #{tpu_custom_call.1} parent=1 // pred_region
      _
    $region21: #{tpu_custom_call.1} parent=1 // pred_fallthru
      _
    // Predicated region
    $region22: #{tpu_custom_call.1} parent=1 // pred_check
      _
    $region23: #{tpu_custom_call.1} parent=1 // pred_check_branch
      %28 = sbr.rel (0) target = $region25
    $region24: #{tpu_custom_call.1} parent=1 // pred_region
      %30 = vsyncadd [#allocation3], 0
      %s31 = sshll.u32 %s5, 4
      %s32 = int_to_ptr.hbm [resolvable:$true] %s31
      %s33 = sshll.u32 [#allocation2], 4
      %s34 = int_to_ptr.vmem [resolvable:$true] %s33
      %39 = dma.hbm_to_vmem [thread:$0]  %s32, 1024, %s34, [#allocation3], 64, 64, 4
    $region25: #{tpu_custom_call.1} parent=1 // pred_fallthru
      _
    // Predicated region
    $region26: #{tpu_custom_call.1} parent=1 // pred_check
      _
    $region27: #{tpu_custom_call.1} parent=1 // pred_check_branch
      %41 = sbr.rel (0) target = $region29
    $region28: #{tpu_custom_call.1} parent=1 // pred_region
      _
    $region29: #{tpu_custom_call.1} parent=1 // pred_fallthru
      _
    // Predicated region
    $region30: #{tpu_custom_call.1} parent=1 // pred_check
      _
    $region31: #{tpu_custom_call.1} parent=1 // pred_check_branch
      %43 = sbr.rel (0) target = $region33
    $region32: #{tpu_custom_call.1} parent=1 // pred_region
      %45 = vsyncadd [#allocation6], 0
      %s46 = sshll.u32 %s7, 4
      %s47 = int_to_ptr.hbm [resolvable:$true] %s46
      %s48 = sshll.u32 [#allocation5], 4
      %s49 = int_to_ptr.vmem [resolvable:$true] %s48
      %54 = dma.hbm_to_vmem [thread:$0]  %s47, 1024, %s49, [#allocation6], 64, 64, 4
    $region33: #{tpu_custom_call.1} parent=1 // pred_fallthru
      _
    // Predicated region
    $region34: #{tpu_custom_call.1} parent=1 // pred_check
      _
    $region35: #{tpu_custom_call.1} parent=1 // pred_check_branch
      %56 = sbr.rel (0) target = $region37
    $region36: #{tpu_custom_call.1} parent=1 // pred_region
      _
    $region37: #{tpu_custom_call.1} parent=1 // pred_fallthru
      _
    // Predicated region
    $region38: #{tpu_custom_call.1} parent=1 // pred_check
      _
    $region39: #{tpu_custom_call.1} parent=1 // pred_check_branch
      %58 = sbr.rel (0) target = $region41
    $region40: #{tpu_custom_call.1} parent=1 // pred_region
      %60 = dma.done [#allocation3], 1024
    $region41: #{tpu_custom_call.1} parent=1 // pred_fallthru
      _
    // Predicated region
    $region42: #{tpu_custom_call.1} parent=1 // pred_check
      _
    $region43: #{tpu_custom_call.1} parent=1 // pred_check_branch
      %62 = sbr.rel (0) target = $region45
    $region44: #{tpu_custom_call.1} parent=1 // pred_region
      %64 = dma.done [#allocation6], 1024
    $region45: #{tpu_custom_call.1} parent=1 // pred_fallthru
      _
    %v65 = vld [vmem:[%s0] sm:$0xff]
    %v66 = vld [vmem:[%s2] sm:$0xf]
    %v67 = vld [vmem:[%s1] sm:$0xff]
    %v68 = vld [vmem:[%s3] sm:$0xf]
    %vm69 = vcmask 31744
    %v71 = vsel %vm69, %v67, 0
    %vm73 = vcmask 1043456
    %v75 = vsel %vm73, %v68, 0
    %77 = vmatpush.msra.mxu0 0.0
    %78 = vmatpush.msra.mxu0 0.0
    %79 = vmatpush.msra.mxu0 0.0
    %80 = vmatpush.msra.mxu0 0.0
    %81 = vmatpush.msra.mxu0 0.0
    %82 = vmatpush.msra.mxu0 0.0
    %83 = vmatpush.msra.mxu0 0.0
    %84 = vmatpush.msra.mxu0 0.0
    %85 = vmatpush.msra.mxu0 0.0
    %86 = vmatpush.msra.mxu0 0.0
    %87 = vmatpush.msra.mxu0 0.0
    %88 = vmatpush.msra.mxu0 0.0
    %89 = vmatpush.msra.mxu0 0.0
    %90 = vmatpush.msra.mxu0 0.0
    %91 = vmatpush.msra.mxu0 0.0
    %92 = vmatpush.msra.mxu0 %v75
    %93 = vmatmul.f32.gmra.mxu0 %v71
    %v94 = vpop.f32.mrf.mxu0
    %v95 = vadd.f32 0.0, %v94
    %96 = vdwg.mxu0
    %v98 = vsel %vm69, %v65, 0
    %v101 = vsel %vm73, %v66, 0
    %103 = vmatpush.msra.mxu0 0.0
    %104 = vmatpush.msra.mxu0 0.0
    %105 = vmatpush.msra.mxu0 0.0
    %106 = vmatpush.msra.mxu0 0.0
    %107 = vmatpush.msra.mxu0 0.0
    %108 = vmatpush.msra.mxu0 0.0
    %109 = vmatpush.msra.mxu0 0.0
    %110 = vmatpush.msra.mxu0 0.0
    %111 = vmatpush.msra.mxu0 0.0
    %112 = vmatpush.msra.mxu0 0.0
    %113 = vmatpush.msra.mxu0 0.0
    %114 = vmatpush.msra.mxu0 0.0
    %115 = vmatpush.msra.mxu0 0.0
    %116 = vmatpush.msra.mxu0 0.0
    %117 = vmatpush.msra.mxu0 0.0
    %118 = vmatpush.msra.mxu0 %v101
    %119 = vmatmul.f32.gmra.mxu0 %v98
    %v120 = vpop.f32.mrf.mxu0
    %v121 = vadd.f32 %v95, %v120
    %122 = vdwg.mxu0
    %v123 = vld [vmem:[%s4] sm:$0x1]
    %v125 = vperm.slane %v123, 0
    %v127 = vadd.f32 %v121, %v125
    %v128 = vtanh.pop %v127
    %v129 = vpack.c.bf16 %v128, %v128
    %v130 = vld [vmem:[#allocation2] sm:$0xf]
    %v131 = vld [vmem:[#allocation2 + $0x4] sm:$0xf]
    %v132 = vld [vmem:[#allocation2 + $0x8] sm:$0xf]
    %v133 = vld [vmem:[#allocation2 + $0xc] sm:$0xf]
    %v134 = vld [vmem:[#allocation2 + $0x10] sm:$0xf]
    %v135 = vld [vmem:[#allocation2 + $0x14] sm:$0xf]
    %v136 = vld [vmem:[#allocation2 + $0x18] sm:$0xf]
    %v137 = vld [vmem:[#allocation2 + $0x1c] sm:$0xf]
    %v138 = vld [vmem:[#allocation2 + $0x20] sm:$0xf]
    %v139 = vld [vmem:[#allocation2 + $0x24] sm:$0xf]
    %v140 = vld [vmem:[#allocation2 + $0x28] sm:$0xf]
    %v141 = vld [vmem:[#allocation2 + $0x2c] sm:$0xf]
    %v142 = vld [vmem:[#allocation2 + $0x30] sm:$0xf]
    %v143 = vld [vmem:[#allocation2 + $0x34] sm:$0xf]
    %v144 = vld [vmem:[#allocation2 + $0x38] sm:$0xf]
    %v145 = vld [vmem:[#allocation2 + $0x3c] sm:$0xf]
    %v146 = vld [vmem:[%s6] sm:$0x1]
    %v148 = vperm.slane %v146, 0
    %v166 = vunpack.c.l.b16 %v130
    %v167 = vunpack.c.l.b16 %v131
    %v168 = vunpack.c.l.b16 %v132
    %v169 = vunpack.c.l.b16 %v133
    %v170 = vunpack.c.l.b16 %v134
    %v171 = vunpack.c.l.b16 %v135
    %v172 = vunpack.c.l.b16 %v136
    %v173 = vunpack.c.l.b16 %v137
    %v174 = vunpack.c.l.b16 %v138
    %v175 = vunpack.c.l.b16 %v139
    %v176 = vunpack.c.l.b16 %v140
    %v177 = vunpack.c.l.b16 %v141
    %v178 = vunpack.c.l.b16 %v142
    %v179 = vunpack.c.l.b16 %v143
    %v180 = vunpack.c.l.b16 %v144
    %v181 = vunpack.c.l.b16 %v145
    %v182 = vpack.c.b16 %v167, %v166
    %v183 = vpack.c.b16 %v169, %v168
    %v184 = vpack.c.b16 %v171, %v170
    %v185 = vpack.c.b16 %v173, %v172
    %v186 = vpack.c.b16 %v175, %v174
    %v187 = vpack.c.b16 %v177, %v176
    %v188 = vpack.c.b16 %v179, %v178
    %v189 = vpack.c.b16 %v181, %v180
    %198 = vmatpush.bf16.msra.mxu0 %v189
    %199 = vmatpush.bf16.msra.mxu0 %v188
    %200 = vmatpush.bf16.msra.mxu0 %v187
    %201 = vmatpush.bf16.msra.mxu0 %v186
    %202 = vmatpush.bf16.msra.mxu0 %v185
    %203 = vmatpush.bf16.msra.mxu0 %v184
    %204 = vmatpush.bf16.msra.mxu0 %v183
    %205 = vmatpush.bf16.msra.mxu0 %v182
    %206 = vmatmul.bf16.gmra.mxu0 %v129
    %v207 = vpop.f32.mrf.mxu0
    %v208 = vadd.f32 %v148, %v207
    %v209 = vpop.f32.mrf.mxu0
    %210 = vdwg.mxu0
    %v211 = vtanh.pop %v208
    %v212 = vpack.c.bf16 %v211, %v211
    %v213 = vld [vmem:[#allocation5] sm:$0xf]
    %v214 = vld [vmem:[#allocation5 + $0x4] sm:$0xf]
    %v215 = vld [vmem:[#allocation5 + $0x8] sm:$0xf]
    %v216 = vld [vmem:[#allocation5 + $0xc] sm:$0xf]
    %v217 = vld [vmem:[#allocation5 + $0x10] sm:$0xf]
    %v218 = vld [vmem:[#allocation5 + $0x14] sm:$0xf]
    %v219 = vld [vmem:[#allocation5 + $0x18] sm:$0xf]
    %v220 = vld [vmem:[#allocation5 + $0x1c] sm:$0xf]
    %v221 = vld [vmem:[#allocation5 + $0x20] sm:$0xf]
    %v222 = vld [vmem:[#allocation5 + $0x24] sm:$0xf]
    %v223 = vld [vmem:[#allocation5 + $0x28] sm:$0xf]
    %v224 = vld [vmem:[#allocation5 + $0x2c] sm:$0xf]
    %v225 = vld [vmem:[#allocation5 + $0x30] sm:$0xf]
    %v226 = vld [vmem:[#allocation5 + $0x34] sm:$0xf]
    %v227 = vld [vmem:[#allocation5 + $0x38] sm:$0xf]
    %v228 = vld [vmem:[#allocation5 + $0x3c] sm:$0xf]
    %v229 = vld [vmem:[%s8] sm:$0x1]
    %v231 = vperm.slane %v229, 0
    %v249 = vunpack.c.l.b16 %v213
    %v250 = vunpack.c.l.b16 %v214
    %v251 = vunpack.c.l.b16 %v215
    %v252 = vunpack.c.l.b16 %v216
    %v253 = vunpack.c.l.b16 %v217
    %v254 = vunpack.c.l.b16 %v218
    %v255 = vunpack.c.l.b16 %v219
    %v256 = vunpack.c.l.b16 %v220
    %v257 = vunpack.c.l.b16 %v221
    %v258 = vunpack.c.l.b16 %v222
    %v259 = vunpack.c.l.b16 %v223
    %v260 = vunpack.c.l.b16 %v224
    %v261 = vunpack.c.l.b16 %v225
    %v262 = vunpack.c.l.b16 %v226
    %v263 = vunpack.c.l.b16 %v227
    %v264 = vunpack.c.l.b16 %v228
    %v265 = vpack.c.b16 %v250, %v249
    %v266 = vpack.c.b16 %v252, %v251
    %v267 = vpack.c.b16 %v254, %v253
    %v268 = vpack.c.b16 %v256, %v255
    %v269 = vpack.c.b16 %v258, %v257
    %v270 = vpack.c.b16 %v260, %v259
    %v271 = vpack.c.b16 %v262, %v261
    %v272 = vpack.c.b16 %v264, %v263
    %281 = vmatpush.bf16.msra.mxu0 %v272
    %282 = vmatpush.bf16.msra.mxu0 %v271
    %283 = vmatpush.bf16.msra.mxu0 %v270
    %284 = vmatpush.bf16.msra.mxu0 %v269
    %285 = vmatpush.bf16.msra.mxu0 %v268
    %286 = vmatpush.bf16.msra.mxu0 %v267
    %287 = vmatpush.bf16.msra.mxu0 %v266
    %288 = vmatpush.bf16.msra.mxu0 %v265
    %289 = vmatmul.bf16.gmra.mxu0 %v212
    %v290 = vpop.f32.mrf.mxu0
    %v291 = vadd.f32 %v231, %v290
    %v292 = vpop.f32.mrf.mxu0
    %293 = vdwg.mxu0
    %294 = vst [vmem:[#allocation7] sm:$0xff] %v291
    // Predicated region
    $region46: #{tpu_custom_call.1} parent=1 // pred_check
      _
    $region47: #{tpu_custom_call.1} parent=1 // pred_check_branch
      %296 = sbr.rel (0) target = $region49
    $region48: #{tpu_custom_call.1} parent=1 // pred_region
      %298 = vsyncadd [#allocation4], 0
      %s300 = sshll.u32 [#allocation7], 4
      %s301 = int_to_ptr.vmem [resolvable:$true] %s300
      %s302 = sshll.u32 %s9, 4
      %s303 = int_to_ptr.hbm [resolvable:$true] %s302
      %305 = dma.vmem_to_hbm [thread:$0]  %s301, 128, %s303, [#allocation4]
    $region49: #{tpu_custom_call.1} parent=1 // pred_fallthru
      _
    // Predicated region
    $region50: #{tpu_custom_call.1} parent=1 // pred_check
      _
    $region51: #{tpu_custom_call.1} parent=1 // pred_check_branch
      %307 = sbr.rel (0) target = $region53
    $region52: #{tpu_custom_call.1} parent=1 // pred_region
      %309 = dma.done [#allocation4], 128
    $region53: #{tpu_custom_call.1} parent=1 // pred_fallthru
      _
    %310 = vsyncpa [#allocation3], 1
    %311 = vsyncpa [#allocation6], 1
    %312 = vsyncpa [#allocation4], 1

</llo_original>
